<compile_context>
chip_gen: v7x
topology: tpu7x:2x2x1
jax: 0.10.0
libtpu: 0.0.40
codegen_flags: <defaults>
</compile_context>

<pallas_src>
import functools
import math

import jax
import jax.numpy as jnp
from jax.experimental import pallas as pl
from jax.experimental.pallas import tpu as pltpu


# --------------------------------------------------------------------------- #
# Generation-aware compiler parameters / tiling helpers
# --------------------------------------------------------------------------- #
@functools.lru_cache(maxsize=1)
def _default_vmem_limit():
    """~Half of physical VMEM (v5e/v6e: 128 MiB -> 64 MiB, v7x: 64 MiB -> 32 MiB)."""
    try:
        cap = int(pltpu.get_tpu_info().vmem_capacity_bytes)
    except Exception:  # conservative fallback if the query is unavailable
        cap = 64 * 1024 * 1024
    return max(32 * 1024 * 1024, min(cap // 2, 96 * 1024 * 1024))


def _compiler_params():
    return pltpu.CompilerParams(
        dimension_semantics=("parallel",),          # megacore sharding on v7x
        vmem_limit_bytes=int(_default_vmem_limit()),
    )


def _resident_spec(shape, d_model):
    """BlockSpec for a weight/bias that stays resident in VMEM (constant index).
    For large d_model, request single buffering so the constant block is not
    double-buffered (v7x 64 MiB VMEM guard)."""
    nd = len(shape)
    kwargs = {}
    if d_model >= 1024:
        kwargs["pipeline_mode"] = pl.Buffered(1)
    return pl.BlockSpec(shape, lambda i, _nd=nd: (0,) * _nd, **kwargs)


def _row_tile(n, min_tile):
    """Row tile: multiple of min_tile (8 for f32, 16 for bf16 outputs), <= 512
    (v7x friendly) and giving >= 2 grid steps when possible (megacore)."""
    if n <= min_tile:
        return max(n, 1)
    tm = ((n // 2) // min_tile) * min_tile
    return max(min(tm, 512), min_tile)


def _batch_tile(b):
    """Batches per attention grid step: maximize per-step work while keeping
    >= 2 steps when b >= 2 (v7x megacore)."""
    for bt in (8, 4, 2, 1):
        if b % bt == 0 and b // bt >= 2:
            return bt
    return 1


# --------------------------------------------------------------------------- #
# Kernel 1: fused Q/K/V projection.
#   Groups: self-attn -> 1 input x, weight (D, 3D); cross-attn (k is v) ->
#   inputs (q, kv), weights (D, D) + (D, 2D); fully distinct -> 3 inputs.
#   Weights / biases stay resident in VMEM; grid streams row tiles of B*S.
# --------------------------------------------------------------------------- #
def _fused_proj_kernel(*refs, group_sizes):
    n_g = len(group_sizes)
    x_refs = refs[:n_g]
    w_refs = refs[n_g:2 * n_g]
    b_refs = refs[2 * n_g:3 * n_g]
    out_refs = refs[3 * n_g:]
    d_out = out_refs[0].shape[-1]

    out_iter = iter(out_refs)
    for g in range(n_g):
        w = w_refs[g][...]
        y = jnp.dot(x_refs[g][...].astype(w.dtype), w,
                    preferred_element_type=jnp.float32)
        y = y + b_refs[g][...]                      # bias kept in f32
        for j in range(group_sizes[g]):
            o_ref = next(out_iter)
            o_ref[...] = y[:, j * d_out:(j + 1) * d_out].astype(o_ref.dtype)


def _qkv_projection(xs, ws, bs, group_sizes, d_model, fast):
    n = xs[0].shape[0]
    out_dtype = jnp.bfloat16 if fast else jnp.float32
    tm = _row_tile(n, 16 if fast else 8)
    grid = (pl.cdiv(n, tm),)
    row_spec = pl.BlockSpec((tm, d_model), lambda i: (i, 0))
    in_specs = ([row_spec] * len(xs)
                + [_resident_spec(w.shape, d_model) for w in ws]
                + [_resident_spec(b.shape, d_model) for b in bs])
    return pl.pallas_call(
        functools.partial(_fused_proj_kernel, group_sizes=tuple(group_sizes)),
        out_shape=tuple(jax.ShapeDtypeStruct((n, d_model), out_dtype)
                        for _ in range(3)),
        grid=grid,
        in_specs=in_specs,
        out_specs=(row_spec, row_spec, row_spec),
        compiler_params=_compiler_params(),
    )(*xs, *ws, *bs)


# --------------------------------------------------------------------------- #
# Kernel 2: fused attention + output projection.
#   scores = softmax(q @ k^T)  (1/sqrt(dh) pre-folded into the Q projection)
#   ctx    = scores @ v
#   out    = ctx.view(B, -1, D) @ wfc^T + bfc      (regroup done via scratch)
# --------------------------------------------------------------------------- #
def _attn_outproj_kernel(q_ref, k_ref, v_ref, wo_ref, bo_ref, o_ref, ctx_scr,
                         *, fast):
    bt, n_heads, seq, dh = q_ref.shape

    # leading-dim collapse only (last two dims untouched) -> free
    g = bt * n_heads
    q = q_ref[...].reshape(g, seq, dh)
    k = k_ref[...].reshape(g, seq, dh)
    v = v_ref[...].reshape(g, seq, dh)

    scores = jnp.einsum("gqd,gkd->gqk", q, k,
                        preferred_element_type=jnp.float32)     # (g, S, S) f32
    m = jnp.max(scores, axis=-1, keepdims=True)
    e = jnp.exp(scores - m)
    den = jnp.sum(e, axis=-1, keepdims=True)
    p = e * pl.reciprocal(den, approx=True) if fast else e / den
    ctx = jnp.einsum("gqk,gkd->gqd", p.astype(v.dtype), v,
                     preferred_element_type=jnp.float32)        # (g, S, dh) f32

    wo = wo_ref[...]                                            # (D, D) resident
    bo = bo_ref[...].astype(jnp.float32)                        # (1, D)
    for b in range(bt):
        # Stage this batch's heads in flat chunk order (row = h*S + s): exactly
        # the row-major flattening behind torch's `.view(B, H, -1, dh)`.
        for h in range(n_heads):
            ctx_scr[h * seq:(h + 1) * seq, :] = ctx[b * n_heads + h]
        # Output row s0 consumes chunks [s0*H, (s0+1)*H); chunk-column j is the
        # stride-H row set starting at row j of the scratch.
        cols = [ctx_scr[pl.ds(j, seq, stride=n_heads), :] for j in range(n_heads)]
        ctx2d = jnp.concatenate(cols, axis=-1).astype(wo.dtype)  # (S, D)
        out = jnp.dot(ctx2d, wo, preferred_element_type=jnp.float32) + bo
        o_ref[b] = out.astype(o_ref.dtype)


def _attention_outproj(qh, kh, vh, w_o, b_o, *, fast):
    b, h, s, dh = qh.shape
    d_model = w_o.shape[-1]
    bt = _batch_tile(b)
    qkv_spec = pl.BlockSpec((bt, h, s, dh), lambda i: (i, 0, 0, 0))
    return pl.pallas_call(
        functools.partial(_attn_outproj_kernel, fast=fast),
        out_shape=jax.ShapeDtypeStruct((b, s, d_model), jnp.float32),
        grid=(b // bt,),
        in_specs=[qkv_spec, qkv_spec, qkv_spec,
                  _resident_spec(w_o.shape, d_model),
                  _resident_spec(b_o.shape, d_model)],
        out_specs=pl.BlockSpec((bt, s, d_model), lambda i: (i, 0, 0)),
        scratch_shapes=[pltpu.VMEM((h * s, dh), jnp.float32)],
        compiler_params=_compiler_params(),
    )(qh, kh, vh, w_o, b_o)


# --------------------------------------------------------------------------- #
# One-time parameter preprocessing (hoisted out of the forward pass)
# --------------------------------------------------------------------------- #
def prepare_params(params, n_heads, *, fast=False):
    """PyTorch nn.Linear stores (Dout, Din): transpose once to (Din, Dout),
    fold 1/sqrt(dh) into the Q projection, pre-concatenate the fused-QKV
    weights, and optionally cast matmul weights to bf16 (fast path)."""
    d_model = params["wq"].shape[0]
    assert d_model % n_heads == 0
    dh = d_model // n_heads
    scale = jnp.float32(1.0 / math.sqrt(dh))
    w_dt = jnp.bfloat16 if fast else jnp.float32

    wq_t = (params["wq"].T * scale).astype(w_dt)
    wk_t = params["wk"].T.astype(w_dt)
    wv_t = params["wv"].T.astype(w_dt)
    bq = (params["bq"] * scale).astype(jnp.float32).reshape(1, d_model)
    bk = params["bk"].astype(jnp.float32).reshape(1, d_model)
    bv = params["bv"].astype(jnp.float32).reshape(1, d_model)

    proj = {
        # self-attention (encoder attn / decoder attn1): x read once
        "self": ((jnp.concatenate([wq_t, wk_t, wv_t], axis=1),),
                 (jnp.concatenate([bq, bk, bv], axis=1),), (3,)),
        # cross-attention (decoder attn2): q and kv inputs
        "kv": ((wq_t, jnp.concatenate([wk_t, wv_t], axis=1)),
               (bq, jnp.concatenate([bk, bv], axis=1)), (1, 2)),
        # fully distinct q / k / v (not used by SummaryTransformer, kept for
        # completeness)
        "sep": ((wq_t, wk_t, wv_t), (bq, bk, bv), (1, 1, 1)),
    }
    return {
        "n_heads": n_heads, "d_model": d_model, "dh": dh, "fast": fast,
        "proj": proj,
        "w_o": params["wfc"].T.astype(w_dt),                        # (D, D)
        "b_o": params["bfc"].astype(jnp.float32).reshape(1, d_model),
    }


# --------------------------------------------------------------------------- #
# MHAttention forward (mask=None, g_mask=None, eval mode)
# --------------------------------------------------------------------------- #
def mh_attention_forward(prepped, q, k, v):
    B, S, D = q.shape
    H, fast = prepped["n_heads"], prepped["fast"]
    dh = prepped["dh"]
    assert D == prepped["d_model"]
    N = B * S

    if q is k and k is v:
        ws, bs, sizes = prepped["proj"]["self"]
        xs = (q.reshape(N, D),)
    elif k is v:
        ws, bs, sizes = prepped["proj"]["kv"]
        xs = (q.reshape(N, D), k.reshape(N, D))
    else:
        ws, bs, sizes = prepped["proj"]["sep"]
        xs = (q.reshape(N, D), k.reshape(N, D), v.reshape(N, D))

    qp, kp, vp = _qkv_projection(xs, ws, bs, sizes, D, fast)

    # torch `.view(B, n_heads, -1, dh)` == plain row-major reshape; on the HBM
    # result this is metadata-only (free).
    qh = qp.reshape(B, H, S, dh)
    kh = kp.reshape(B, H, S, dh)
    vh = vp.reshape(B, H, S, dh)

    return _attention_outproj(qh, kh, vh, prepped["w_o"], prepped["b_o"],
                              fast=fast)


# --------------------------------------------------------------------------- #
# Pure-JAX reference (mirrors the PyTorch module exactly)
# --------------------------------------------------------------------------- #
def reference_forward(params, q, k, v, n_heads):
    B, S, D = q.shape
    dh = D // n_heads

    def lin(x, w, b):
        return x @ w.T + b

    qh = lin(q, params["wq"], params["bq"]).reshape(B, n_heads, -1, dh)
    kh = lin(k, params["wk"], params["bk"]).reshape(B, n_heads, -1, dh)
    vh = lin(v, params["wv"], params["bv"]).reshape(B, n_heads, -1, dh)
    s = jnp.einsum("bhqd,bhkd->bhqk", qh, kh) / math.sqrt(dh)
    p = jax.nn.softmax(s, axis=-1)
    o = jnp.einsum("bhqk,bhkd->bhqd", p, vh).reshape(B, -1, D)
    return lin(o, params["wfc"], params["bfc"])


if __name__ == "__main__":
    # shapes consistent with the module: d_model=32, n_heads=4 (dh=8), seq=8
    B, S, D, H = 2, 8, 32, 4
    key = jax.random.PRNGKey(0)
    ks = jax.random.split(key, 12)

    def init_w(kk):
        return jax.random.normal(kk, (D, D), dtype=jnp.float32) * 0.05

    def init_b(kk):
        return jax.random.normal(kk, (D,), dtype=jnp.float32) * 0.05

    params = {
        "wq": init_w(ks[0]), "bq": init_b(ks[1]),
        "wk": init_w(ks[2]), "bk": init_b(ks[3]),
        "wv": init_w(ks[4]), "bv": init_b(ks[5]),
        "wfc": init_w(ks[6]), "bfc": init_b(ks[7]),
    }

    x = jax.random.normal(ks[8], (B, S, D), dtype=jnp.float32)
    enc = jax.random.normal(ks[9], (B, S, D), dtype=jnp.float32)

    # --- self-attention path (encoder attn / decoder attn1), exact f32 ---
    prepped = prepare_params(params, H, fast=False)
    out = jax.block_until_ready(mh_attention_forward(prepped, x, x, x))
    ref = reference_forward(params, x, x, x, H)
    assert out.shape == (B, S, D)
    assert jnp.allclose(out, ref, rtol=1e-4, atol=1e-4), "self-attn f32 mismatch"

    # --- cross-attention path (decoder attn2: q != k, k is v), exact f32 ---
    out_x = jax.block_until_ready(mh_attention_forward(prepped, x, enc, enc))
    ref_x = reference_forward(params, x, enc, enc, H)
    assert jnp.allclose(out_x, ref_x, rtol=1e-4, atol=1e-4), "cross-attn f32 mismatch"

    # --- fast path: bf16 weights + bf16 HBM intermediates, f32 softmax/accum ---
    prepped_fast = prepare_params(params, H, fast=True)
    out_f = jax.block_until_ready(mh_attention_forward(prepped_fast, x, x, x))
    assert jnp.allclose(out_f, ref, rtol=5e-2, atol=5e-2), "fast path mismatch"

    print("KERNEL_OK")
</pallas_src>

<mosaic_0001>
module attributes {stable_mosaic.version = 11 : i64} {
  func.func @_fused_proj_kernel(%arg0: i32, %arg1: memref<8x32xf32, #tpu.memory_space<vmem>>, %arg2: memref<32x96xf32, #tpu.memory_space<vmem>>, %arg3: memref<1x96xf32, #tpu.memory_space<vmem>>, %arg4: memref<8x32xf32, #tpu.memory_space<vmem>>, %arg5: memref<8x32xf32, #tpu.memory_space<vmem>>, %arg6: memref<8x32xf32, #tpu.memory_space<vmem>>) attributes {dimension_semantics = [#tpu.dimension_semantics<parallel>], iteration_bounds = array<i64: 2>, scalar_prefetch = 0 : i64, scratch_operands = 0 : i64, tpu.core_type = #tpu.core_type<tc>, window_params = [{transform_indices = @transform_0, window_bounds = array<i64: 8, 32>}, {pipeline_mode = #tpu.pipeline_mode<synchronous>, transform_indices = @transform_1, window_bounds = array<i64: 32, 96>}, {pipeline_mode = #tpu.pipeline_mode<synchronous>, transform_indices = @transform_2, window_bounds = array<i64: 1, 96>}, {transform_indices = @transform_3, window_bounds = array<i64: 8, 32>}, {transform_indices = @transform_4, window_bounds = array<i64: 8, 32>}, {transform_indices = @transform_5, window_bounds = array<i64: 8, 32>}]} {
    %c0 = arith.constant 0 : index
    %c0_0 = arith.constant 0 : index
    %0 = vector.load %arg2[%c0, %c0_0] : memref<32x96xf32, #tpu.memory_space<vmem>>, vector<32x96xf32>
    %c0_1 = arith.constant 0 : index
    %c0_2 = arith.constant 0 : index
    %1 = vector.load %arg1[%c0_1, %c0_2] : memref<8x32xf32, #tpu.memory_space<vmem>>, vector<8x32xf32>
    %cst = arith.constant dense<0.000000e+00> : vector<8x96xf32>
    %2 = tpu.matmul %1, %0, %cst {dimension_numbers = #tpu.dot_dimension_numbers<[1], [0], [0], [1], [0, 0, 1, 1], [], []>} : vector<8x32xf32>, vector<32x96xf32>, vector<8x96xf32> -> vector<8x96xf32>
    %c0_3 = arith.constant 0 : index
    %c0_4 = arith.constant 0 : index
    %3 = vector.load %arg3[%c0_3, %c0_4] : memref<1x96xf32, #tpu.memory_space<vmem>>, vector<1x96xf32>
    %4 = vector.broadcast %3 : vector<1x96xf32> to vector<8x96xf32>
    %5 = arith.addf %2, %4 : vector<8x96xf32>
    %6 = vector.extract_strided_slice %5 {offsets = [0, 0], sizes = [8, 32], strides = [1, 1]} : vector<8x96xf32> to vector<8x32xf32>
    %c0_5 = arith.constant 0 : index
    %c0_6 = arith.constant 0 : index
    %7 = vector.load %arg4[%c0_5, %c0_6] : memref<8x32xf32, #tpu.memory_space<vmem>>, vector<8x32xf32>
    tpu.vector_store %arg4[%c0_5, %c0_6], %6 {strides = array<i32>} : memref<8x32xf32, #tpu.memory_space<vmem>>, vector<8x32xf32>,
    %8 = vector.extract_strided_slice %5 {offsets = [0, 32], sizes = [8, 32], strides = [1, 1]} : vector<8x96xf32> to vector<8x32xf32>
    %c0_7 = arith.constant 0 : index
    %c0_8 = arith.constant 0 : index
    %9 = vector.load %arg5[%c0_7, %c0_8] : memref<8x32xf32, #tpu.memory_space<vmem>>, vector<8x32xf32>
    tpu.vector_store %arg5[%c0_7, %c0_8], %8 {strides = array<i32>} : memref<8x32xf32, #tpu.memory_space<vmem>>, vector<8x32xf32>,
    %10 = vector.extract_strided_slice %5 {offsets = [0, 64], sizes = [8, 32], strides = [1, 1]} : vector<8x96xf32> to vector<8x32xf32>
    %c0_9 = arith.constant 0 : index
    %c0_10 = arith.constant 0 : index
    %11 = vector.load %arg6[%c0_9, %c0_10] : memref<8x32xf32, #tpu.memory_space<vmem>>, vector<8x32xf32>
    tpu.vector_store %arg6[%c0_9, %c0_10], %10 {strides = array<i32>} : memref<8x32xf32, #tpu.memory_space<vmem>>, vector<8x32xf32>,
    return
  }
  func.func @transform_0(%arg0: i32) -> (i32, i32) {
    %c0_i32 = arith.constant 0 : i32
    %c0_i32_0 = arith.constant 0 : i32
    return %arg0, %c0_i32 : i32, i32
  }
  func.func @transform_1(%arg0: i32) -> (i32, i32) {
    %c0_i32 = arith.constant 0 : i32
    %c0_i32_0 = arith.constant 0 : i32
    %c0_i32_1 = arith.constant 0 : i32
    return %c0_i32, %c0_i32_0 : i32, i32
  }
  func.func @transform_2(%arg0: i32) -> (i32, i32) {
    %c0_i32 = arith.constant 0 : i32
    %c0_i32_0 = arith.constant 0 : i32
    %c0_i32_1 = arith.constant 0 : i32
    return %c0_i32, %c0_i32_0 : i32, i32
  }
  func.func @transform_3(%arg0: i32) -> (i32, i32) {
    %c0_i32 = arith.constant 0 : i32
    %c0_i32_0 = arith.constant 0 : i32
    return %arg0, %c0_i32 : i32, i32
  }
  func.func @transform_4(%arg0: i32) -> (i32, i32) {
    %c0_i32 = arith.constant 0 : i32
    %c0_i32_0 = arith.constant 0 : i32
    return %arg0, %c0_i32 : i32, i32
  }
  func.func @transform_5(%arg0: i32) -> (i32, i32) {
    %c0_i32 = arith.constant 0 : i32
    %c0_i32_0 = arith.constant 0 : i32
    return %arg0, %c0_i32 : i32, i32
  }
}

</mosaic_0001>

<llo_original>
// kernel: tpu_custom_call.1
$region0: #{tpu_custom_call.1}
  #allocation0 [shape = 'u32[]', space=smem, size = 0x4, offset = 0x4, fixed_abs, tag = 'smem constant byte address 0x4 - core index']
  #allocation1 [shape = 'u32[144,128]{1,0:T(1,128)}', space=vmem, size = 0x12000, scoped, tag = 'internal scratch']
  %s0 = inlined_call_operand.hbm [shape: f32[16,32], index: 0, kind: input, shape index: {}]
  %s1 = inlined_call_operand.hbm [shape: f32[32,96], index: 1, kind: input, shape index: {}]
  %s2 = inlined_call_operand.vmem [shape: f32[1,96], index: 2, kind: input, shape index: {}]
  %s3 = inlined_call_operand.hbm [shape: f32[16,32], index: 3, kind: output, shape index: {0}]
  %s4 = inlined_call_operand.hbm [shape: f32[16,32], index: 4, kind: output, shape index: {1}]
  %s5 = inlined_call_operand.hbm [shape: f32[16,32], index: 5, kind: output, shape index: {2}]
  %6 = xla_tuple %s3, %s4, %s5
  %s7 = sld [smem:[#allocation0]]
  $region69: #{tpu_custom_call.1} parent=0
    _
  %s9 = ssub.s32 1, %s7
  %s10 = scalar_select 0, %s9, %s7
  $region1: #{tpu_custom_call.1} parent=0
    #allocation2 [shape = 'u8[8192]{0}', space=vmem, size = 0x2000, scoped, tag = 'input window, operand 0']
    #allocation3 [shape = 's32[2]{0}', space=sflag, size = 0x8, scoped, tag = 'scoped memory for tpu_custom_call.1']
    #allocation4 [shape = 's32[2]{0}', space=sflag, size = 0x8, scoped, tag = 'scoped memory for tpu_custom_call.1']
    #allocation5 [shape = 'u8[16384]{0}', space=vmem, size = 0x4000, scoped, tag = 'input window, operand 1, single buffered']
    #allocation6 [shape = 's32[1]{0}', space=sflag, size = 0x4, scoped, tag = 'scoped memory for tpu_custom_call.1']
    #allocation7 [shape = 'u8[8192]{0}', space=vmem, size = 0x2000, scoped, tag = 'output window, operand 0']
    #allocation8 [shape = 'u8[8192]{0}', space=vmem, size = 0x2000, scoped, tag = 'output window, operand 1']
    #allocation9 [shape = 's32[2]{0}', space=sflag, size = 0x8, scoped, tag = 'scoped memory for tpu_custom_call.1']
    #allocation10 [shape = 'u8[8192]{0}', space=vmem, size = 0x2000, scoped, tag = 'output window, operand 2']
    %11 = vsyncpa [#allocation3], 0
    %s12 = scalar_lea.sflag [#allocation3], 1
    %13 = vsyncpa %s12, 0
    %14 = vsyncpa [#allocation6], 0
    %15 = vsyncpa [#allocation4], 0
    %s16 = scalar_lea.sflag [#allocation4], 1
    %17 = vsyncpa %s16, 0
    %18 = vsyncpa [#allocation9], 0
    %s19 = scalar_lea.sflag [#allocation9], 1
    %20 = vsyncpa %s19, 0
    loop: start=0, step=1, limit=4
    $region2: #{tpu_custom_call.1} parent=1 // loop_pre_header
      _
    $region3: #{tpu_custom_call.1} parent=1 // loop_header
      %s22 = sphi 0, %s26
      %p23 = scmp.ge.s32.totalorder %s22, 4
      %s32 = sphi 0, %s34
      %s35 = sphi 0, %s32
      %s36 = sphi 0, %s35
      %s52 = sphi 0, %s36
      %s56 = sphi 0, %s56
      %s58 = sphi 0, %s56
      %s59 = sphi 0, %s58
      %s73 = sphi 0, %s59
      %s77 = sphi 0, %s77
      %s79 = sphi 0, %s77
      %s80 = sphi 0, %s79
      %s94 = sphi 0, %s80
      %s100 = sphi 0, %s102
      %s103 = sphi 0, %s100
      %s104 = sphi 0, %s103
      %s120 = sphi 0, %s104
      %s126 = sphi 0, %s128
      %s129 = sphi 0, %s126
      %s130 = sphi 0, %s129
      %s146 = sphi 0, %s130
      %s152 = sphi 0, %s154
      %s155 = sphi 0, %s152
      %s156 = sphi 0, %s155
      %s172 = sphi 0, %s156
    $region4: #{tpu_custom_call.1} parent=1 // loop_header_branch
      %25 = sbr.rel (%p23) target = $region8
    $region5: #{tpu_custom_call.1} parent=1 // loop_body
      %s27 = ssub.s32 %s22, 1
      %s28 = ssub.s32 %s22, 2
      %s29 = sadd.s32 %s22, 1
      %s30 = ssub.s32 %s22, %s29
      %p31 = scmp.eq.s32.totalorder %s30, 0
      %s33 = sadd.s32 %s32, 1
      %s34 = scalar_select %p31, %s32, %s33
      %p37 = pneg %p31
      %p38 = scmp.eq.s32.totalorder %s22, 1
      %p39 = por %p37, %p38
      %p40 = scmp.ne.s32.totalorder %s32, %s35
      %p41 = scmp.eq.s32.totalorder %s22, 0
      %p42 = por %p40, %p41
      %p43 = scmp.ne.s32.totalorder %s32, %s35
      %p44 = scmp.eq.s32.totalorder %s27, 1
      %p45 = por %p43, %p44
      %p46 = scmp.ne.s32.totalorder %s35, %s36
      %p47 = scmp.eq.s32.totalorder %s27, 0
      %p48 = por %p46, %p47
      %p49 = scmp.ne.s32.totalorder %s35, %s36
      %p50 = scmp.eq.s32.totalorder %s28, 1
      %p51 = por %p49, %p50
      %p53 = scmp.ne.s32.totalorder %s36, %s52
      %p54 = scmp.eq.s32.totalorder %s28, 0
      %p55 = por %p53, %p54
      %s57 = sadd.s32 %s56, 1
      %p60 = scmp.eq.s32.totalorder %s22, 1
      %p61 = scmp.ne.s32.totalorder %s56, %s58
      %p62 = scmp.eq.s32.totalorder %s22, 0
      %p63 = por %p61, %p62
      %p64 = scmp.ne.s32.totalorder %s56, %s58
      %p65 = scmp.eq.s32.totalorder %s27, 1
      %p66 = por %p64, %p65
      %p67 = scmp.ne.s32.totalorder %s58, %s59
      %p68 = scmp.eq.s32.totalorder %s27, 0
      %p69 = por %p67, %p68
      %p70 = scmp.ne.s32.totalorder %s58, %s59
      %p71 = scmp.eq.s32.totalorder %s28, 1
      %p72 = por %p70, %p71
      %p74 = scmp.ne.s32.totalorder %s59, %s73
      %p75 = scmp.eq.s32.totalorder %s28, 0
      %p76 = por %p74, %p75
      %s78 = sadd.s32 %s77, 1
      %p81 = scmp.eq.s32.totalorder %s22, 1
      %p82 = scmp.ne.s32.totalorder %s77, %s79
      %p83 = scmp.eq.s32.totalorder %s22, 0
      %p84 = por %p82, %p83
      %p85 = scmp.ne.s32.totalorder %s77, %s79
      %p86 = scmp.eq.s32.totalorder %s27, 1
      %p87 = por %p85, %p86
      %p88 = scmp.ne.s32.totalorder %s79, %s80
      %p89 = scmp.eq.s32.totalorder %s27, 0
      %p90 = por %p88, %p89
      %p91 = scmp.ne.s32.totalorder %s79, %s80
      %p92 = scmp.eq.s32.totalorder %s28, 1
      %p93 = por %p91, %p92
      %p95 = scmp.ne.s32.totalorder %s80, %s94
      %p96 = scmp.eq.s32.totalorder %s28, 0
      %p97 = por %p95, %p96
      %s98 = ssub.s32 %s22, %s29
      %p99 = scmp.eq.s32.totalorder %s98, 0
      %s101 = sadd.s32 %s100, 1
      %s102 = scalar_select %p99, %s100, %s101
      %p105 = pneg %p99
      %p106 = scmp.eq.s32.totalorder %s22, 1
      %p107 = por %p105, %p106
      %p108 = scmp.ne.s32.totalorder %s100, %s103
      %p109 = scmp.eq.s32.totalorder %s22, 0
      %p110 = por %p108, %p109
      %p111 = scmp.ne.s32.totalorder %s100, %s103
      %p112 = scmp.eq.s32.totalorder %s27, 1
      %p113 = por %p111, %p112
      %p114 = scmp.ne.s32.totalorder %s103, %s104
      %p115 = scmp.eq.s32.totalorder %s27, 0
      %p116 = por %p114, %p115
      %p117 = scmp.ne.s32.totalorder %s103, %s104
      %p118 = scmp.eq.s32.totalorder %s28, 1
      %p119 = por %p117, %p118
      %p121 = scmp.ne.s32.totalorder %s104, %s120
      %p122 = scmp.eq.s32.totalorder %s28, 0
      %p123 = por %p121, %p122
      %s124 = ssub.s32 %s22, %s29
      %p125 = scmp.eq.s32.totalorder %s124, 0
      %s127 = sadd.s32 %s126, 1
      %s128 = scalar_select %p125, %s126, %s127
      %p131 = pneg %p125
      %p132 = scmp.eq.s32.totalorder %s22, 1
      %p133 = por %p131, %p132
      %p134 = scmp.ne.s32.totalorder %s126, %s129
      %p135 = scmp.eq.s32.totalorder %s22, 0
      %p136 = por %p134, %p135
      %p137 = scmp.ne.s32.totalorder %s126, %s129
      %p138 = scmp.eq.s32.totalorder %s27, 1
      %p139 = por %p137, %p138
      %p140 = scmp.ne.s32.totalorder %s129, %s130
      %p141 = scmp.eq.s32.totalorder %s27, 0
      %p142 = por %p140, %p141
      %p143 = scmp.ne.s32.totalorder %s129, %s130
      %p144 = scmp.eq.s32.totalorder %s28, 1
      %p145 = por %p143, %p144
      %p147 = scmp.ne.s32.totalorder %s130, %s146
      %p148 = scmp.eq.s32.totalorder %s28, 0
      %p149 = por %p147, %p148
      %s150 = ssub.s32 %s22, %s29
      %p151 = scmp.eq.s32.totalorder %s150, 0
      %s153 = sadd.s32 %s152, 1
      %s154 = scalar_select %p151, %s152, %s153
      %p157 = pneg %p151
      %p158 = scmp.eq.s32.totalorder %s22, 1
      %p159 = por %p157, %p158
      %p160 = scmp.ne.s32.totalorder %s152, %s155
      %p161 = scmp.eq.s32.totalorder %s22, 0
      %p162 = por %p160, %p161
      %p163 = scmp.ne.s32.totalorder %s152, %s155
      %p164 = scmp.eq.s32.totalorder %s27, 1
      %p165 = por %p163, %p164
      %p166 = scmp.ne.s32.totalorder %s155, %s156
      %p167 = scmp.eq.s32.totalorder %s27, 0
      %p168 = por %p166, %p167
      %p169 = scmp.ne.s32.totalorder %s155, %s156
      %p170 = scmp.eq.s32.totalorder %s28, 1
      %p171 = por %p169, %p170
      %p173 = scmp.ne.s32.totalorder %s156, %s172
      %p174 = scmp.eq.s32.totalorder %s28, 0
      %p175 = por %p173, %p174
      %p176 = scmp.le.s32.totalorder 1, %s22
      %p177 = scmp.lt.s32.totalorder %s22, 3
      %p178 = pnand %p176, %p177
      %p179 = pneg %p178
      // Predicated region
      $region9: #{tpu_custom_call.1} parent=5 // pred_check
        _
      $region10: #{tpu_custom_call.1} parent=5 // pred_check_branch
        %181 = sbr.rel (%p178) target = $region12
      $region11: #{tpu_custom_call.1} parent=5 // pred_region
        %s182 = ssub.s32 %s22, 1
        // Predicated region
        $region13: #{tpu_custom_call.1} parent=11 // pred_check
          %p183 = pneg %p69
        $region14: #{tpu_custom_call.1} parent=11 // pred_check_branch
          %185 = sbr.rel (%p183) target = $region16
        $region15: #{tpu_custom_call.1} parent=11 // pred_region
          %s187 = ssub.s32 512, 512
          %188 = vsyncadd [#allocation6], %s187
          %s189 = sshll.u32 [#allocation5], 4
          %s190 = int_to_ptr.vmem [resolvable:$true] %s189
          %195 = dma.hbm_to_vmem [thread:$0]  %s1, 512, %s190, [#allocation6], 128, 128, 8
        $region16: #{tpu_custom_call.1} parent=11 // pred_fallthru
          _
        // Predicated region
        $region17: #{tpu_custom_call.1} parent=11 // pred_check
          %p196 = pneg %p90
        $region18: #{tpu_custom_call.1} parent=11 // pred_check_branch
          %198 = sbr.rel (%p196) target = $region20
        $region19: #{tpu_custom_call.1} parent=11 // pred_region
          _
        $region20: #{tpu_custom_call.1} parent=11 // pred_fallthru
          _
      $region12: #{tpu_custom_call.1} parent=5 // pred_fallthru
        _
      %p199 = scmp.lt.s32.totalorder %s22, 2
      // Predicated region
      $region21: #{tpu_custom_call.1} parent=5 // pred_check
        %p200 = pneg %p199
      $region22: #{tpu_custom_call.1} parent=5 // pred_check_branch
        %202 = sbr.rel (%p200) target = $region24
      $region23: #{tpu_custom_call.1} parent=5 // pred_region
        // Predicated region
        $region25: #{tpu_custom_call.1} parent=23 // pred_check
          %p203 = pneg %p42
        $region26: #{tpu_custom_call.1} parent=23 // pred_check_branch
          %205 = sbr.rel (%p203) target = $region28
        $region27: #{tpu_custom_call.1} parent=23 // pred_region
          %s206 = sand.u32 %s32, 1
          %s207 = scalar_lea.sflag [#allocation3], %s206
          %s208 = sand.u32 %s32, 1
          %s209 = smul.addr %s208, 8
          %s210 = scalar_lea.vmem [#allocation2], %s209
          %s212 = ssub.s32 128, 128
          %213 = vsyncadd %s207, %s212
          %s214 = smul.addr %s22, 128
          %s215 = scalar_lea.hbm %s0, %s214
          %s217 = sshll.u32 %s210, 4
          %s218 = int_to_ptr.vmem [resolvable:$true] %s217
          %220 = dma.hbm_to_vmem [thread:$0]  %s215, 128, %s218, %s207
        $region28: #{tpu_custom_call.1} parent=23 // pred_fallthru
          _
      $region24: #{tpu_custom_call.1} parent=5 // pred_fallthru
        _
      %p221 = scmp.le.s32.totalorder 1, %s22
      %p222 = scmp.lt.s32.totalorder %s22, 3
      %p223 = pnand %p221, %p222
      %p224 = pneg %p223
      // Predicated region
      $region29: #{tpu_custom_call.1} parent=5 // pred_check
        _
      $region30: #{tpu_custom_call.1} parent=5 // pred_check_branch
        %226 = sbr.rel (%p223) target = $region32
      $region31: #{tpu_custom_call.1} parent=5 // pred_region
        %s227 = ssub.s32 %s22, 1
        %s228 = sand.u32 %s35, 1
        %s229 = scalar_lea.sflag [#allocation3], %s228
        %s230 = sand.u32 %s35, 1
        %s231 = smul.addr %s230, 8
        %s232 = scalar_lea.vmem [#allocation2], %s231
        // Predicated region
        $region33: #{tpu_custom_call.1} parent=31 // pred_check
          %p233 = pneg %p48
        $region34: #{tpu_custom_call.1} parent=31 // pred_check_branch
          %235 = sbr.rel (%p233) target = $region36
        $region35: #{tpu_custom_call.1} parent=31 // pred_region
          %236 = dma.done %s229, 128
        $region36: #{tpu_custom_call.1} parent=31 // pred_fallthru
          _
        // Predicated region
        $region37: #{tpu_custom_call.1} parent=31 // pred_check
          %p237 = pneg %p69
        $region38: #{tpu_custom_call.1} parent=31 // pred_check_branch
          %239 = sbr.rel (%p237) target = $region40
        $region39: #{tpu_custom_call.1} parent=31 // pred_region
          %240 = dma.done [#allocation6], 512
        $region40: #{tpu_custom_call.1} parent=31 // pred_fallthru
          _
        %s241 = sand.u32 %s35, 1
        %s242 = scalar_lea.sflag [#allocation3], %s241
        %s243 = sand.u32 %s35, 1
        %s244 = smul.addr %s243, 8
        %s245 = scalar_lea.vmem [#allocation2], %s244
        %p246 = pneg %p48
        %p247 = pneg %p45
        %p248 = pneg %p69
        %p249 = pneg %p66
        %p250 = pneg %p90
        %p251 = pneg %p87
        %p252 = pneg %p116
        %p253 = pneg %p113
        %s254 = sand.u32 %s103, 1
        %s255 = scalar_lea.sflag [#allocation4], %s254
        %s256 = sand.u32 %s103, 1
        %s257 = smul.addr %s256, 8
        %s258 = scalar_lea.vmem [#allocation7], %s257
        %p259 = pneg %p142
        %p260 = pneg %p139
        %s261 = sand.u32 %s27, 1
        %s262 = scalar_lea.sflag [#allocation9], %s261
        %s263 = sand.u32 %s129, 1
        %s264 = smul.addr %s263, 8
        %s265 = scalar_lea.vmem [#allocation8], %s264
        %p266 = pneg %p168
        %p267 = pneg %p165
        %s268 = sand.u32 %s27, 1
        %s269 = scalar_lea.sflag [#allocation9], %s268
        %s270 = sand.u32 %s155, 1
        %s271 = smul.addr %s270, 8
        %s272 = scalar_lea.vmem [#allocation10], %s271
        %v273 = vld [vmem:[#allocation5] sm:$0xff]
        %v274 = vld [vmem:[#allocation5 + $0x8] sm:$0xff]
        %v275 = vld [vmem:[#allocation5 + $0x10] sm:$0xff]
        %v276 = vld [vmem:[#allocation5 + $0x18] sm:$0xff]
        %v277 = vld [vmem:[%s232] sm:$0xff]
        %v278 = vld [vmem:[%s2] sm:$0x1]
        %v280 = vlaneseq
        %v281 = vshrl.u32 %v280, 7
        %v282 = vsub.s32 0, %v281
        %v283 = vrot.slane %v278, %v282
        %vm285 = vcmask 261120
        %v287 = vsel %vm285, %v277, 0
        %289 = vmatprep.subr.mxu0 0.0
        %290 = vmatpush1.msra.mxu0 %v273
        %291 = vmatprep.subr.mxu0 0.0
        %292 = vmatpush1.msra.mxu0 %v274
        %293 = vmatprep.subr.mxu0 0.0
        %294 = vmatpush1.msra.mxu0 %v275
        %295 = vmatprep.subr.mxu0 0.0
        %296 = vmatpush1.msra.mxu0 %v276
        %297 = vmatprep.subr.mxu0 0.0
        %298 = vmatpush1.msra.mxu0 0.0
        %299 = vmatprep.subr.mxu0 0.0
        %300 = vmatpush1.msra.mxu0 0.0
        %301 = vmatprep.subr.mxu0 0.0
        %302 = vmatpush1.msra.mxu0 0.0
        %303 = vmatprep.subr.mxu0 0.0
        %304 = vmatpush1.msra.mxu0 0.0
        %305 = vmatprep.subr.mxu0 0.0
        %306 = vmatpush1.msra.mxu0 0.0
        %307 = vmatprep.subr.mxu0 0.0
        %308 = vmatpush1.msra.mxu0 0.0
        %309 = vmatprep.subr.mxu0 0.0
        %310 = vmatpush1.msra.mxu0 0.0
        %311 = vmatprep.subr.mxu0 0.0
        %312 = vmatpush1.msra.mxu0 0.0
        %313 = vmatprep.subr.mxu0 0.0
        %314 = vmatpush1.msra.mxu0 0.0
        %315 = vmatprep.subr.mxu0 0.0
        %316 = vmatpush1.msra.mxu0 0.0
        %317 = vmatprep.subr.mxu0 0.0
        %318 = vmatpush1.msra.mxu0 0.0
        %319 = vmatprep.subr.mxu0 0.0
        %320 = vmatpush1.msra.mxu0 0.0
        %321 = vmatprep.subr.mxu0 0.0
        %322 = vmatpush1.msra.mxu0 0.0
        %323 = vmatprep.subr.mxu0 0.0
        %324 = vmatpush1.msra.mxu0 0.0
        %325 = vmatprep.subr.mxu0 0.0
        %326 = vmatpush1.msra.mxu0 0.0
        %327 = vmatprep.subr.mxu0 0.0
        %328 = vmatpush1.msra.mxu0 0.0
        %329 = vmatprep.subr.mxu0 0.0
        %330 = vmatpush1.msra.mxu0 0.0
        %331 = vmatprep.subr.mxu0 0.0
        %332 = vmatpush1.msra.mxu0 0.0
        %333 = vmatprep.subr.mxu0 0.0
        %334 = vmatpush1.msra.mxu0 0.0
        %335 = vmatprep.subr.mxu0 0.0
        %336 = vmatpush1.msra.mxu0 0.0
        %337 = vmatprep.subr.mxu0 0.0
        %338 = vmatpush1.msra.mxu0 0.0
        %339 = vmatprep.subr.mxu0 0.0
        %340 = vmatpush1.msra.mxu0 0.0
        %341 = vmatprep.subr.mxu0 0.0
        %342 = vmatpush1.msra.mxu0 0.0
        %343 = vmatprep.subr.mxu0 0.0
        %344 = vmatpush1.msra.mxu0 0.0
        %345 = vmatprep.subr.mxu0 0.0
        %346 = vmatpush1.msra.mxu0 0.0
        %347 = vmatprep.subr.mxu0 0.0
        %348 = vmatpush1.msra.mxu0 0.0
        %349 = vmatprep.subr.mxu0 0.0
        %350 = vmatpush1.msra.mxu0 0.0
        %351 = vmatprep.subr.mxu0 0.0
        %352 = vmatpush1.msra.mxu0 0.0
        %353 = vmatprep.mubr.f32.mxu0 0.0
        %354 = vmatmul.mubr.f32.gmra.mrb[0].mxu0 %v287
        %v355 = vpop.f32.mrb[0].mxu0
        %v356 = vadd.f32 %v283, %v355
        %v357 = vpop.f32.mrb[0].mxu0
        %358 = vdwg.mxu0
        %359 = vst.msk [vmem:[%s258] sm:$0xff] %vm285, %v356
        %361 = vrot.lane.b32.xlu0 %v356, 96
        %v362 = vpop.permute.xlu0 %361
        %364 = vst.msk [vmem:[%s265] sm:$0xff] %vm285, %v362
        %365 = vrot.lane.b32.xlu0 %v356, 64
        %v366 = vpop.permute.xlu0 %365
        %368 = vst.msk [vmem:[%s272] sm:$0xff] %vm285, %v366
        %s369 = sand.u32 %s103, 1
        %s370 = scalar_lea.sflag [#allocation4], %s369
        %s371 = sand.u32 %s103, 1
        %s372 = smul.addr %s371, 8
        %s373 = scalar_lea.vmem [#allocation7], %s372
        %s374 = sand.u32 %s27, 1
        %s375 = scalar_lea.sflag [#allocation9], %s374
        %s376 = sand.u32 %s129, 1
        %s377 = smul.addr %s376, 8
        %s378 = scalar_lea.vmem [#allocation8], %s377
        %s379 = sand.u32 %s27, 1
        %s380 = scalar_lea.sflag [#allocation9], %s379
        %s381 = sand.u32 %s155, 1
        %s382 = smul.addr %s381, 8
        %s383 = scalar_lea.vmem [#allocation10], %s382
        // Predicated region
        $region41: #{tpu_custom_call.1} parent=31 // pred_check
          %p384 = pneg %p113
        $region42: #{tpu_custom_call.1} parent=31 // pred_check_branch
          %386 = sbr.rel (%p384) target = $region44
        $region43: #{tpu_custom_call.1} parent=31 // pred_region
          %s388 = ssub.s32 128, 128
          %389 = vsyncadd %s370, %s388
          %s390 = smul.addr %s27, 128
          %s391 = scalar_lea.hbm %s3, %s390
          %s393 = sshll.u32 %s373, 4
          %s394 = int_to_ptr.vmem [resolvable:$true] %s393
          %396 = dma.vmem_to_hbm [thread:$0]  %s394, 128, %s391, %s370
        $region44: #{tpu_custom_call.1} parent=31 // pred_fallthru
          _
        // Predicated region
        $region45: #{tpu_custom_call.1} parent=31 // pred_check
          %p397 = pneg %p139
        $region46: #{tpu_custom_call.1} parent=31 // pred_check_branch
          %399 = sbr.rel (%p397) target = $region48
        $region47: #{tpu_custom_call.1} parent=31 // pred_region
          %s401 = ssub.s32 128, 128
          %402 = vsyncadd %s375, %s401
          %s403 = smul.addr %s27, 128
          %s404 = scalar_lea.hbm %s4, %s403
          %s406 = sshll.u32 %s378, 4
          %s407 = int_to_ptr.vmem [resolvable:$true] %s406
          %409 = dma.vmem_to_hbm [thread:$0]  %s407, 128, %s404, %s375
        $region48: #{tpu_custom_call.1} parent=31 // pred_fallthru
          _
        // Predicated region
        $region49: #{tpu_custom_call.1} parent=31 // pred_check
          %p410 = pneg %p165
        $region50: #{tpu_custom_call.1} parent=31 // pred_check_branch
          %412 = sbr.rel (%p410) target = $region52
        $region51: #{tpu_custom_call.1} parent=31 // pred_region
          %s414 = ssub.s32 128, 128
          %415 = vsyncadd %s380, %s414
          %s416 = smul.addr %s27, 128
          %s417 = scalar_lea.hbm %s5, %s416
          %s419 = sshll.u32 %s383, 4
          %s420 = int_to_ptr.vmem [resolvable:$true] %s419
          %422 = dma.vmem_to_hbm [thread:$0]  %s420, 128, %s417, %s380
        $region52: #{tpu_custom_call.1} parent=31 // pred_fallthru
          _
      $region32: #{tpu_custom_call.1} parent=5 // pred_fallthru
        _
      %p423 = scmp.le.s32.totalorder 2, %s22
      // Predicated region
      $region53: #{tpu_custom_call.1} parent=5 // pred_check
        %p424 = pneg %p423
      $region54: #{tpu_custom_call.1} parent=5 // pred_check_branch
        %426 = sbr.rel (%p424) target = $region56
      $region55: #{tpu_custom_call.1} parent=5 // pred_region
        %s427 = ssub.s32 %s22, 2
        // Predicated region
        $region57: #{tpu_custom_call.1} parent=55 // pred_check
          %p428 = pneg %p119
        $region58: #{tpu_custom_call.1} parent=55 // pred_check_branch
          %430 = sbr.rel (%p428) target = $region60
        $region59: #{tpu_custom_call.1} parent=55 // pred_region
          %s431 = sand.u32 %s104, 1
          %s432 = scalar_lea.sflag [#allocation4], %s431
          %s433 = sand.u32 %s104, 1
          %s434 = smul.addr %s433, 8
          %s435 = scalar_lea.vmem [#allocation7], %s434
          %436 = dma.done %s432, 128
        $region60: #{tpu_custom_call.1} parent=55 // pred_fallthru
          _
        // Predicated region
        $region61: #{tpu_custom_call.1} parent=55 // pred_check
          %p437 = pneg %p145
        $region62: #{tpu_custom_call.1} parent=55 // pred_check_branch
          %439 = sbr.rel (%p437) target = $region64
        $region63: #{tpu_custom_call.1} parent=55 // pred_region
          %s440 = sand.u32 %s28, 1
          %s441 = scalar_lea.sflag [#allocation9], %s440
          %s442 = sand.u32 %s130, 1
          %s443 = smul.addr %s442, 8
          %s444 = scalar_lea.vmem [#allocation8], %s443
          %445 = dma.done %s441, 128
        $region64: #{tpu_custom_call.1} parent=55 // pred_fallthru
          _
        // Predicated region
        $region65: #{tpu_custom_call.1} parent=55 // pred_check
          %p446 = pneg %p171
        $region66: #{tpu_custom_call.1} parent=55 // pred_check_branch
          %448 = sbr.rel (%p446) target = $region68
        $region67: #{tpu_custom_call.1} parent=55 // pred_region
          %s449 = sand.u32 %s28, 1
          %s450 = scalar_lea.sflag [#allocation9], %s449
          %s451 = sand.u32 %s156, 1
          %s452 = smul.addr %s451, 8
          %s453 = scalar_lea.vmem [#allocation10], %s452
          %454 = dma.done %s450, 128
        $region68: #{tpu_custom_call.1} parent=55 // pred_fallthru
          _
      $region56: #{tpu_custom_call.1} parent=5 // pred_fallthru
        _
    $region6: #{tpu_custom_call.1} parent=1 // loop_footer
      %s26 = sadd.s32 1, %s22
    $region7: #{tpu_custom_call.1} parent=1 // loop_footer_branch
      %21 = sbr.rel target = $region3
    $region8: #{tpu_custom_call.1} parent=1 // loop_exit
      _
    %455 = vsyncpa [#allocation3], 1
    %s456 = scalar_lea.sflag [#allocation3], 1
    %457 = vsyncpa %s456, 1
    %458 = vsyncpa [#allocation6], 1
    %459 = vsyncpa [#allocation4], 1
    %s460 = scalar_lea.sflag [#allocation4], 1
    %461 = vsyncpa %s460, 1
    %462 = vsyncpa [#allocation9], 1
    %s463 = scalar_lea.sflag [#allocation9], 1
    %464 = vsyncpa %s463, 1

</llo_original>
